<compile_context>
chip_gen: v5e
topology: v5e:2x2
jax: 0.10.0
libtpu: 0.0.40
codegen_flags: <defaults>
</compile_context>

<pallas_src>
import logging
import zlib

import numpy as np
import jax
import jax.numpy as jnp
from jax import lax
from jax.experimental import pallas as pl
from jax.experimental.pallas import tpu as pltpu


def get_logger():
    return logging.getLogger("loss_func_utils")


# ----------------------------------------------------------------------------
# Pallas kernel: batched N(0,1) fill (equivalent of torch `param.data.normal_()`)
# ----------------------------------------------------------------------------
_LANE = 128                 # lane-dense last dim (TPU native width)
_MAX_ROW_TILE = 4096        # 4096 x 128 x 4B = 2 MiB per output block
                            # (2 double-buffered blocks fit easily even in
                            #  v7x's 32 MiB scoped-VMEM default)

# Integer hash constants (lowbias32-style finalizer), kept as signed int32.
_M1 = np.int32(0x7FEB352D)
_M2 = np.int32(-2073254261)       # 0x846CA68B
_GOLD = np.int32(-1640531527)     # 0x9E3779B9

# Beasley-Springer-Moro inverse normal CDF coefficients.
_BSM_A = (2.50662823884, -18.61500062529, 41.39119773534, -25.44106049637)
_BSM_B = (-8.47351093090, 23.08336743743, -21.06224101826, 3.13082909833)
_BSM_C = (0.3374754822726147, 0.9761690190917186, 0.1607979714918209,
          0.0276438810333863, 0.0038405729373609, 0.0003951896511919,
          0.0000321767881768, 0.0000002888167364, 0.0000003960315187)


def _lshr(x, k):
    """Logical right shift of an int32 array by a static amount."""
    return (x >> k) & np.int32((1 << (32 - k)) - 1)


def _mix32(x):
    """lowbias32-style avalanche mix (wrapping int32 arithmetic)."""
    x = x ^ _lshr(x, 16)
    x = x * _M1
    x = x ^ _lshr(x, 15)
    x = x * _M2
    x = x ^ _lshr(x, 16)
    return x


def _inv_normal_cdf(u):
    """Beasley-Springer-Moro approximation of Phi^-1(u), u in (0, 1)."""
    y = u - 0.5
    r = y * y
    num = y * (((_BSM_A[3] * r + _BSM_A[2]) * r + _BSM_A[1]) * r + _BSM_A[0])
    den = ((((_BSM_B[3] * r + _BSM_B[2]) * r + _BSM_B[1]) * r + _BSM_B[0]) * r
           + 1.0)
    central = num / den
    rt = jnp.where(y > 0, 1.0 - u, u)          # in (0, 0.5] -> log args safe
    s = jnp.log(-jnp.log(rt))
    t = _BSM_C[8]
    for c in _BSM_C[7::-1]:
        t = t * s + c
    tail = jnp.where(y > 0, t, -t)
    return jnp.where(jnp.abs(y) <= 0.42, central, tail)


def _normal_fill_kernel(seed_ref, out_ref):
    rows, cols = out_ref.shape
    i = pl.program_id(0)
    row_ids = lax.broadcasted_iota(jnp.int32, (rows, cols), 0)
    col_ids = lax.broadcasted_iota(jnp.int32, (rows, cols), 1)
    # Unique global counter per element of the whole slab -> every grid step
    # (and every parameter) gets distinct samples; no per-tile repetition.
    idx = (i * rows + row_ids) * cols + col_ids
    seed = seed_ref[0]
    bits = _mix32(_mix32(idx * _GOLD + seed) ^ seed)
    bits24 = _lshr(bits, 8)                                      # [0, 2^24)
    # Generate in f32 (v5e has no bf16 VPU/EUP path); cast only at the store.
    u = (bits24.astype(jnp.float32) + 0.5) * np.float32(2.0 ** -24)  # (0, 1)
    out_ref[...] = _inv_normal_cdf(u).astype(out_ref.dtype)


def _round_up(x, m):
    return ((x + m - 1) // m) * m


def pallas_normal_slab(n_rows, seed, dtype=jnp.float32):
    """Fill a lane-dense (padded_rows, 128) slab with iid N(0,1) samples."""
    n_rows = max(int(n_rows), 1)
    row_tile = min(_MAX_ROW_TILE, _round_up(n_rows, 8))   # (8,128)-aligned
    padded_rows = _round_up(n_rows, row_tile)
    n_tiles = padded_rows // row_tile
    seed_arr = jnp.asarray([seed], dtype=jnp.int32)
    return pl.pallas_call(
        _normal_fill_kernel,
        out_shape=jax.ShapeDtypeStruct((padded_rows, _LANE), dtype),
        grid_spec=pltpu.PrefetchScalarGridSpec(
            num_scalar_prefetch=1,              # seed lives in SMEM
            grid=(n_tiles,),
            in_specs=[],
            out_specs=pl.BlockSpec((row_tile, _LANE),
                                   lambda i, seed_ref: (i, 0)),
        ),
        compiler_params=pltpu.CompilerParams(
            dimension_semantics=("parallel",)),
    )(seed_arr)


# ----------------------------------------------------------------------------
# JAX port of the PyTorch module.
# ----------------------------------------------------------------------------
class BaseLossFunc:
    """JAX/Pallas equivalent of the PyTorch BaseLossFunc base class."""

    def __init__(self, **kwargs):
        self.enabled = True
        self.unregistered = {}
        self.logger = get_logger()
        self.seed = 0                      # caller-overridable base seed
        self._params = {}                  # name -> jnp.ndarray
        self.init_defaults()
        for k, v in kwargs.items():
            if k in self.unregistered:
                self.unregistered[k] = v
                continue
            setattr(self, k, v)
        self.init_parameters()
        self.reset_parameters()

    @classmethod
    def from_kwargs_dict(cls, context, kwargs_dict):
        kwargs_dict['_cuda'] = context['cuda']
        return cls(**kwargs_dict)

    def init_defaults(self):
        pass

    def init_parameters(self):
        # Base class registers no parameters (matches `pass` in PyTorch).
        pass

    def parameters(self):
        return list(self._params.values())

    def _base_seed(self):
        # Salt the user seed with the class name so two different loss modules
        # never get bit-identical "random" initializations.
        salt = zlib.crc32(type(self).__name__.encode("utf-8"))
        v = (int(self.seed) * 0x9E3779B1 + salt) & 0xFFFFFFFF
        return v - (1 << 32) if v >= (1 << 31) else v

    def reset_parameters(self):
        # `param.data.normal_()` for every trainable parameter, executed as a
        # SINGLE batched Pallas fill: pack all params into one lane-dense
        # (rows, 128) slab, fill on-TPU, then split/reshape per parameter.
        names = sorted(self._params)
        if not names:
            return
        shapes = {n: self._params[n].shape for n in names}
        dtypes = {n: self._params[n].dtype for n in names}
        sizes = [int(np.prod(shapes[n], dtype=np.int64)) for n in names]
        offsets = [0]
        for sz in sizes:
            offsets.append(offsets[-1] + sz)
        total = offsets[-1]
        n_rows = -(-total // _LANE)                      # ceil div
        slab = pallas_normal_slab(n_rows, seed=self._base_seed())
        flat = slab.reshape(-1)
        for n, sz, off in zip(names, sizes, offsets[:-1]):
            self._params[n] = (
                flat[off:off + sz].reshape(shapes[n]).astype(dtypes[n]))

    def forward(self, sentences, neg_samples, diora, info, embed=None):
        # TODO(synk): forward is abstract in the PyTorch base class (raises
        # NotImplementedError); there is no loss math to translate here.
        raise NotImplementedError

    def __call__(self, *args, **kwargs):
        return self.forward(*args, **kwargs)


# Minimal concrete subclass used only to exercise the base-class machinery
# (init_defaults -> kwargs override -> init_parameters -> batched Pallas reset).
class _DemoLossFunc(BaseLossFunc):
    def init_defaults(self):
        self.size = 32

    def init_parameters(self):
        # Two trainable parameters with different shapes to exercise the
        # batched single-pallas_call slab fill + repack path.
        self._params['mat'] = jnp.zeros((self.size, 128), jnp.float32)
        self._params['vec'] = jnp.zeros((50,), jnp.float32)


if __name__ == "__main__":
    key = jax.random.PRNGKey(0)
    batch, seq, size = 2, 8, 32

    # Deterministic example forward() inputs (unused by the abstract forward).
    sentences = jax.random.randint(key, (batch, seq), 0, 100, dtype=jnp.int32)
    neg_samples = jax.random.randint(
        jax.random.fold_in(key, 1), (batch, seq), 0, 100, dtype=jnp.int32)

    loss_fn = _DemoLossFunc(size=size, seed=1234)

    # The Pallas reset kernel ran inside __init__ (reset_parameters); block on it.
    mat = jax.block_until_ready(loss_fn._params['mat'])
    vec = jax.block_until_ready(loss_fn._params['vec'])
    assert mat.shape == (size, 128) and vec.shape == (50,)

    allv = jnp.concatenate([mat.reshape(-1), vec])
    assert bool(jnp.all(jnp.isfinite(allv)))
    assert 0.5 < float(jnp.std(allv)) < 1.5          # looks like N(0,1)
    assert abs(float(jnp.mean(allv))) < 0.2
    assert not bool(jnp.allclose(mat[0], mat[1]))    # samples not repeated

    # Determinism: same class + same seed -> identical initialization.
    loss_fn2 = _DemoLossFunc(size=size, seed=1234)
    assert bool(jnp.array_equal(mat, loss_fn2._params['mat']))

    # forward() matches PyTorch semantics: it must raise NotImplementedError.
    raised = False
    try:
        loss_fn(sentences, neg_samples, diora=None, info={}, embed=None)
    except NotImplementedError:
        raised = True
    assert raised

    print("KERNEL_OK")
</pallas_src>

<mosaic_0001>
module attributes {stable_mosaic.version = 11 : i64} {
  func.func @_normal_fill_kernel(%arg0: i32, %arg1: memref<1xi32, #tpu.memory_space<smem>>, %arg2: memref<40x128xf32, #tpu.memory_space<vmem>>) attributes {dimension_semantics = [#tpu.dimension_semantics<parallel>], iteration_bounds = array<i64: 1>, scalar_prefetch = 1 : i64, scratch_operands = 0 : i64, tpu.core_type = #tpu.core_type<tc>, window_params = [{transform_indices = @transform_0, window_bounds = array<i64: 40, 128>}]} {
    %0 = tpu.iota {dimensions = array<i32: 0>} : vector<40x128xi32>
    %1 = tpu.iota {dimensions = array<i32: 1>} : vector<40x128xi32>
    %c40_i32 = arith.constant 40 : i32
    %2 = arith.muli %arg0, %c40_i32 : i32
    %3 = vector.broadcast %2 : i32 to vector<40x128xi32>
    %4 = arith.addi %3, %0 : vector<40x128xi32>
    %c128_i32 = arith.constant 128 : i32
    %5 = vector.broadcast %c128_i32 : i32 to vector<40x128xi32>
    %6 = arith.muli %4, %5 : vector<40x128xi32>
    %7 = arith.addi %6, %1 : vector<40x128xi32>
    %c0 = arith.constant 0 : index
    %8 = memref.load %arg1[%c0] : memref<1xi32, #tpu.memory_space<smem>>
    %c-1640531527_i32 = arith.constant -1640531527 : i32
    %9 = vector.broadcast %c-1640531527_i32 : i32 to vector<40x128xi32>
    %10 = arith.muli %7, %9 : vector<40x128xi32>
    %11 = vector.broadcast %8 : i32 to vector<40x128xi32>
    %12 = arith.addi %10, %11 : vector<40x128xi32>
    %c16_i32 = arith.constant 16 : i32
    %13 = vector.broadcast %c16_i32 : i32 to vector<40x128xi32>
    %14 = arith.shrsi %12, %13 : vector<40x128xi32>
    %c65535_i32 = arith.constant 65535 : i32
    %15 = vector.broadcast %c65535_i32 : i32 to vector<40x128xi32>
    %16 = arith.andi %14, %15 : vector<40x128xi32>
    %17 = arith.xori %12, %16 : vector<40x128xi32>
    %c2146121005_i32 = arith.constant 2146121005 : i32
    %18 = vector.broadcast %c2146121005_i32 : i32 to vector<40x128xi32>
    %19 = arith.muli %17, %18 : vector<40x128xi32>
    %c15_i32 = arith.constant 15 : i32
    %20 = vector.broadcast %c15_i32 : i32 to vector<40x128xi32>
    %21 = arith.shrsi %19, %20 : vector<40x128xi32>
    %c131071_i32 = arith.constant 131071 : i32
    %22 = vector.broadcast %c131071_i32 : i32 to vector<40x128xi32>
    %23 = arith.andi %21, %22 : vector<40x128xi32>
    %24 = arith.xori %19, %23 : vector<40x128xi32>
    %c-2073254261_i32 = arith.constant -2073254261 : i32
    %25 = vector.broadcast %c-2073254261_i32 : i32 to vector<40x128xi32>
    %26 = arith.muli %24, %25 : vector<40x128xi32>
    %c16_i32_0 = arith.constant 16 : i32
    %27 = vector.broadcast %c16_i32_0 : i32 to vector<40x128xi32>
    %28 = arith.shrsi %26, %27 : vector<40x128xi32>
    %c65535_i32_1 = arith.constant 65535 : i32
    %29 = vector.broadcast %c65535_i32_1 : i32 to vector<40x128xi32>
    %30 = arith.andi %28, %29 : vector<40x128xi32>
    %31 = arith.xori %26, %30 : vector<40x128xi32>
    %32 = vector.broadcast %8 : i32 to vector<40x128xi32>
    %33 = arith.xori %31, %32 : vector<40x128xi32>
    %c16_i32_2 = arith.constant 16 : i32
    %34 = vector.broadcast %c16_i32_2 : i32 to vector<40x128xi32>
    %35 = arith.shrsi %33, %34 : vector<40x128xi32>
    %c65535_i32_3 = arith.constant 65535 : i32
    %36 = vector.broadcast %c65535_i32_3 : i32 to vector<40x128xi32>
    %37 = arith.andi %35, %36 : vector<40x128xi32>
    %38 = arith.xori %33, %37 : vector<40x128xi32>
    %c2146121005_i32_4 = arith.constant 2146121005 : i32
    %39 = vector.broadcast %c2146121005_i32_4 : i32 to vector<40x128xi32>
    %40 = arith.muli %38, %39 : vector<40x128xi32>
    %c15_i32_5 = arith.constant 15 : i32
    %41 = vector.broadcast %c15_i32_5 : i32 to vector<40x128xi32>
    %42 = arith.shrsi %40, %41 : vector<40x128xi32>
    %c131071_i32_6 = arith.constant 131071 : i32
    %43 = vector.broadcast %c131071_i32_6 : i32 to vector<40x128xi32>
    %44 = arith.andi %42, %43 : vector<40x128xi32>
    %45 = arith.xori %40, %44 : vector<40x128xi32>
    %c-2073254261_i32_7 = arith.constant -2073254261 : i32
    %46 = vector.broadcast %c-2073254261_i32_7 : i32 to vector<40x128xi32>
    %47 = arith.muli %45, %46 : vector<40x128xi32>
    %c16_i32_8 = arith.constant 16 : i32
    %48 = vector.broadcast %c16_i32_8 : i32 to vector<40x128xi32>
    %49 = arith.shrsi %47, %48 : vector<40x128xi32>
    %c65535_i32_9 = arith.constant 65535 : i32
    %50 = vector.broadcast %c65535_i32_9 : i32 to vector<40x128xi32>
    %51 = arith.andi %49, %50 : vector<40x128xi32>
    %52 = arith.xori %47, %51 : vector<40x128xi32>
    %c8_i32 = arith.constant 8 : i32
    %53 = vector.broadcast %c8_i32 : i32 to vector<40x128xi32>
    %54 = arith.shrsi %52, %53 : vector<40x128xi32>
    %c16777215_i32 = arith.constant 16777215 : i32
    %55 = vector.broadcast %c16777215_i32 : i32 to vector<40x128xi32>
    %56 = arith.andi %54, %55 : vector<40x128xi32>
    %57 = arith.sitofp %56 : vector<40x128xi32> to vector<40x128xf32>
    %cst = arith.constant 5.000000e-01 : f32
    %58 = vector.broadcast %cst : f32 to vector<40x128xf32>
    %59 = arith.addf %57, %58 : vector<40x128xf32>
    %cst_10 = arith.constant 5.96046448E-8 : f32
    %60 = vector.broadcast %cst_10 : f32 to vector<40x128xf32>
    %61 = arith.mulf %59, %60 : vector<40x128xf32>
    %cst_11 = arith.constant 5.000000e-01 : f32
    %62 = vector.broadcast %cst_11 : f32 to vector<40x128xf32>
    %63 = arith.subf %61, %62 : vector<40x128xf32>
    %64 = arith.mulf %63, %63 : vector<40x128xf32>
    %cst_12 = arith.constant -25.441061 : f32
    %65 = vector.broadcast %cst_12 : f32 to vector<40x128xf32>
    %66 = arith.mulf %65, %64 : vector<40x128xf32>
    %cst_13 = arith.constant 41.3911972 : f32
    %67 = vector.broadcast %cst_13 : f32 to vector<40x128xf32>
    %68 = arith.addf %66, %67 : vector<40x128xf32>
    %69 = arith.mulf %68, %64 : vector<40x128xf32>
    %cst_14 = arith.constant -1.861500e+01 : f32
    %70 = vector.broadcast %cst_14 : f32 to vector<40x128xf32>
    %71 = arith.addf %69, %70 : vector<40x128xf32>
    %72 = arith.mulf %71, %64 : vector<40x128xf32>
    %cst_15 = arith.constant 2.50662827 : f32
    %73 = vector.broadcast %cst_15 : f32 to vector<40x128xf32>
    %74 = arith.addf %72, %73 : vector<40x128xf32>
    %75 = arith.mulf %63, %74 : vector<40x128xf32>
    %cst_16 = arith.constant 3.1308291 : f32
    %76 = vector.broadcast %cst_16 : f32 to vector<40x128xf32>
    %77 = arith.mulf %76, %64 : vector<40x128xf32>
    %cst_17 = arith.constant -21.0622406 : f32
    %78 = vector.broadcast %cst_17 : f32 to vector<40x128xf32>
    %79 = arith.addf %77, %78 : vector<40x128xf32>
    %80 = arith.mulf %79, %64 : vector<40x128xf32>
    %cst_18 = arith.constant 23.0833683 : f32
    %81 = vector.broadcast %cst_18 : f32 to vector<40x128xf32>
    %82 = arith.addf %80, %81 : vector<40x128xf32>
    %83 = arith.mulf %82, %64 : vector<40x128xf32>
    %cst_19 = arith.constant -8.47351074 : f32
    %84 = vector.broadcast %cst_19 : f32 to vector<40x128xf32>
    %85 = arith.addf %83, %84 : vector<40x128xf32>
    %86 = arith.mulf %85, %64 : vector<40x128xf32>
    %cst_20 = arith.constant 1.000000e+00 : f32
    %87 = vector.broadcast %cst_20 : f32 to vector<40x128xf32>
    %88 = arith.addf %86, %87 : vector<40x128xf32>
    %89 = arith.divf %75, %88 : vector<40x128xf32>
    %cst_21 = arith.constant 0.000000e+00 : f32
    %90 = vector.broadcast %cst_21 : f32 to vector<40x128xf32>
    %91 = arith.cmpf ogt, %63, %90 : vector<40x128xf32>
    %cst_22 = arith.constant 1.000000e+00 : f32
    %92 = vector.broadcast %cst_22 : f32 to vector<40x128xf32>
    %93 = arith.subf %92, %61 : vector<40x128xf32>
    %94 = arith.select %91, %93, %61 : vector<40x128xi1>, vector<40x128xf32>
    %95 = math.log %94 : vector<40x128xf32>
    %cst_23 = arith.constant 0.000000e+00 : f32
    %96 = vector.broadcast %cst_23 : f32 to vector<40x128xf32>
    %97 = arith.subf %96, %95 : vector<40x128xf32>
    %98 = math.log %97 : vector<40x128xf32>
    %cst_24 = arith.constant 3.9603151E-7 : f32
    %99 = vector.broadcast %cst_24 : f32 to vector<40x128xf32>
    %100 = arith.mulf %99, %98 : vector<40x128xf32>
    %cst_25 = arith.constant 2.8881675E-7 : f32
    %101 = vector.broadcast %cst_25 : f32 to vector<40x128xf32>
    %102 = arith.addf %100, %101 : vector<40x128xf32>
    %103 = arith.mulf %102, %98 : vector<40x128xf32>
    %cst_26 = arith.constant 3.21767875E-5 : f32
    %104 = vector.broadcast %cst_26 : f32 to vector<40x128xf32>
    %105 = arith.addf %103, %104 : vector<40x128xf32>
    %106 = arith.mulf %105, %98 : vector<40x128xf32>
    %cst_27 = arith.constant 3.95189651E-4 : f32
    %107 = vector.broadcast %cst_27 : f32 to vector<40x128xf32>
    %108 = arith.addf %106, %107 : vector<40x128xf32>
    %109 = arith.mulf %108, %98 : vector<40x128xf32>
    %cst_28 = arith.constant 0.0038405729 : f32
    %110 = vector.broadcast %cst_28 : f32 to vector<40x128xf32>
    %111 = arith.addf %109, %110 : vector<40x128xf32>
    %112 = arith.mulf %111, %98 : vector<40x128xf32>
    %cst_29 = arith.constant 0.0276438817 : f32
    %113 = vector.broadcast %cst_29 : f32 to vector<40x128xf32>
    %114 = arith.addf %112, %113 : vector<40x128xf32>
    %115 = arith.mulf %114, %98 : vector<40x128xf32>
    %cst_30 = arith.constant 0.160797969 : f32
    %116 = vector.broadcast %cst_30 : f32 to vector<40x128xf32>
    %117 = arith.addf %115, %116 : vector<40x128xf32>
    %118 = arith.mulf %117, %98 : vector<40x128xf32>
    %cst_31 = arith.constant 0.97616899 : f32
    %119 = vector.broadcast %cst_31 : f32 to vector<40x128xf32>
    %120 = arith.addf %118, %119 : vector<40x128xf32>
    %121 = arith.mulf %120, %98 : vector<40x128xf32>
    %cst_32 = arith.constant 0.337475479 : f32
    %122 = vector.broadcast %cst_32 : f32 to vector<40x128xf32>
    %123 = arith.addf %121, %122 : vector<40x128xf32>
    %cst_33 = arith.constant 0.000000e+00 : f32
    %124 = vector.broadcast %cst_33 : f32 to vector<40x128xf32>
    %125 = arith.cmpf ogt, %63, %124 : vector<40x128xf32>
    %cst_34 = arith.constant 0.000000e+00 : f32
    %126 = vector.broadcast %cst_34 : f32 to vector<40x128xf32>
    %127 = arith.subf %126, %123 : vector<40x128xf32>
    %128 = arith.select %125, %123, %127 : vector<40x128xi1>, vector<40x128xf32>
    %129 = math.absf %63 : vector<40x128xf32>
    %cst_35 = arith.constant 4.200000e-01 : f32
    %130 = vector.broadcast %cst_35 : f32 to vector<40x128xf32>
    %131 = arith.cmpf ole, %129, %130 : vector<40x128xf32>
    %132 = arith.select %131, %89, %128 : vector<40x128xi1>, vector<40x128xf32>
    %c0_36 = arith.constant 0 : index
    %c0_37 = arith.constant 0 : index
    %133 = vector.load %arg2[%c0_36, %c0_37] : memref<40x128xf32, #tpu.memory_space<vmem>>, vector<40x128xf32>
    tpu.vector_store %arg2[%c0_36, %c0_37], %132 {strides = array<i32>} : memref<40x128xf32, #tpu.memory_space<vmem>>, vector<40x128xf32>,
    return
  }
  func.func @transform_0(%arg0: i32, %arg1: memref<1xi32, #tpu.memory_space<smem>>) -> (i32, i32) {
    %c0_i32 = arith.constant 0 : i32
    %c0_i32_0 = arith.constant 0 : i32
    return %arg0, %c0_i32 : i32, i32
  }
}

</mosaic_0001>

<llo_original>
// kernel: tpu_custom_call.1
$region0: #{tpu_custom_call.1}
  #allocation0 [shape = 'u32[]', space=smem, size = 0x4, offset = 0x4, fixed_abs, tag = 'smem constant byte address 0x4 - core index']
  #allocation1 [shape = 'u32[72,128]{1,0:T(1,128)}', space=vmem, size = 0x9000, scoped, tag = 'internal scratch']
  #allocation2 [shape = 's32[1]{0}', space=sflag, size = 0x4, scoped, tag = 'scoped memory for tpu_custom_call.1']
  #allocation3 [shape = 's32[1]{0:T(128)S(6)}', space=smem, size = 0x200, scoped, tag = 'prefetched SMEM operand 0']
  %s0 = inlined_call_operand.<no memory space> [shape: s32[1], index: 0, kind: input, shape index: {}]
  %s1 = inlined_call_operand.hbm [shape: f32[40,128], index: 1, kind: output, shape index: {}]
  %s2 = sld [smem:[#allocation0]]
  $region10: #{tpu_custom_call.1} parent=0
    _
  %s4 = ssub.s32 1, %s2
  %s5 = scalar_select 0, %s4, %s2
  %6 = sst [smem:[#allocation3]] %s0
  $region1: #{tpu_custom_call.1} parent=0
    #allocation4 [shape = 'u8[20480]{0}', space=vmem, size = 0x5000, scoped, tag = 'output window, operand 0, single buffered']
    #allocation5 [shape = 's32[1]{0}', space=sflag, size = 0x4, scoped, tag = 'scoped memory for tpu_custom_call.1']
    %7 = vsyncpa [#allocation5], 0
    %v8 = vlaneseq
    %v9 = vshrl.u32 %v8, 7
    %v10 = vadd.s32 %v9, 8
    %v11 = vadd.s32 %v9, 16
    %v12 = vadd.s32 %v9, 24
    %v13 = vadd.s32 %v9, 32
    %v14 = vlaneseq
    %v15 = vand.u32 %v14, 127
    %s16 = smul.u32 0, 40
    %v17 = vstv %s16
    %v18 = vadd.s32 %v17, %v9
    %v19 = vadd.s32 %v17, %v10
    %v20 = vadd.s32 %v17, %v11
    %v21 = vadd.s32 %v17, %v12
    %v22 = vadd.s32 %v17, %v13
    %v23 = vmul.u32 %v18, 128
    %v24 = vmul.u32 %v19, 128
    %v25 = vmul.u32 %v20, 128
    %v26 = vmul.u32 %v21, 128
    %v27 = vmul.u32 %v22, 128
    %v28 = vadd.s32 %v23, %v15
    %v29 = vadd.s32 %v24, %v15
    %v30 = vadd.s32 %v25, %v15
    %v31 = vadd.s32 %v26, %v15
    %v32 = vadd.s32 %v27, %v15
    %s33 = sld [smem:[#allocation3]]
    %v34 = vmul.u32 %v28, 2654435769
    %v35 = vmul.u32 %v29, 2654435769
    %v36 = vmul.u32 %v30, 2654435769
    %v37 = vmul.u32 %v31, 2654435769
    %v38 = vmul.u32 %v32, 2654435769
    %v39 = vstv %s33
    %v40 = vadd.s32 %v34, %v39
    %v41 = vadd.s32 %v35, %v39
    %v42 = vadd.s32 %v36, %v39
    %v43 = vadd.s32 %v37, %v39
    %v44 = vadd.s32 %v38, %v39
    %v45 = vshra.s32 %v40, 16
    %v46 = vshra.s32 %v41, 16
    %v47 = vshra.s32 %v42, 16
    %v48 = vshra.s32 %v43, 16
    %v49 = vshra.s32 %v44, 16
    %v50 = vand.u32 %v45, 65535
    %v51 = vand.u32 %v46, 65535
    %v52 = vand.u32 %v47, 65535
    %v53 = vand.u32 %v48, 65535
    %v54 = vand.u32 %v49, 65535
    %v55 = vxor.u32 %v40, %v50
    %v56 = vxor.u32 %v41, %v51
    %v57 = vxor.u32 %v42, %v52
    %v58 = vxor.u32 %v43, %v53
    %v59 = vxor.u32 %v44, %v54
    %v60 = vmul.u32 %v55, 2146121005
    %v61 = vmul.u32 %v56, 2146121005
    %v62 = vmul.u32 %v57, 2146121005
    %v63 = vmul.u32 %v58, 2146121005
    %v64 = vmul.u32 %v59, 2146121005
    %v65 = vshra.s32 %v60, 15
    %v66 = vshra.s32 %v61, 15
    %v67 = vshra.s32 %v62, 15
    %v68 = vshra.s32 %v63, 15
    %v69 = vshra.s32 %v64, 15
    %v70 = vand.u32 %v65, 131071
    %v71 = vand.u32 %v66, 131071
    %v72 = vand.u32 %v67, 131071
    %v73 = vand.u32 %v68, 131071
    %v74 = vand.u32 %v69, 131071
    %v75 = vxor.u32 %v60, %v70
    %v76 = vxor.u32 %v61, %v71
    %v77 = vxor.u32 %v62, %v72
    %v78 = vxor.u32 %v63, %v73
    %v79 = vxor.u32 %v64, %v74
    %v80 = vmul.u32 %v75, 2221713035
    %v81 = vmul.u32 %v76, 2221713035
    %v82 = vmul.u32 %v77, 2221713035
    %v83 = vmul.u32 %v78, 2221713035
    %v84 = vmul.u32 %v79, 2221713035
    %v85 = vshra.s32 %v80, 16
    %v86 = vshra.s32 %v81, 16
    %v87 = vshra.s32 %v82, 16
    %v88 = vshra.s32 %v83, 16
    %v89 = vshra.s32 %v84, 16
    %v90 = vand.u32 %v85, 65535
    %v91 = vand.u32 %v86, 65535
    %v92 = vand.u32 %v87, 65535
    %v93 = vand.u32 %v88, 65535
    %v94 = vand.u32 %v89, 65535
    %v95 = vxor.u32 %v80, %v90
    %v96 = vxor.u32 %v81, %v91
    %v97 = vxor.u32 %v82, %v92
    %v98 = vxor.u32 %v83, %v93
    %v99 = vxor.u32 %v84, %v94
    %v100 = vxor.u32 %v95, %v39
    %v101 = vxor.u32 %v96, %v39
    %v102 = vxor.u32 %v97, %v39
    %v103 = vxor.u32 %v98, %v39
    %v104 = vxor.u32 %v99, %v39
    %v105 = vshra.s32 %v100, 16
    %v106 = vshra.s32 %v101, 16
    %v107 = vshra.s32 %v102, 16
    %v108 = vshra.s32 %v103, 16
    %v109 = vshra.s32 %v104, 16
    %v110 = vand.u32 %v105, 65535
    %v111 = vand.u32 %v106, 65535
    %v112 = vand.u32 %v107, 65535
    %v113 = vand.u32 %v108, 65535
    %v114 = vand.u32 %v109, 65535
    %v115 = vxor.u32 %v100, %v110
    %v116 = vxor.u32 %v101, %v111
    %v117 = vxor.u32 %v102, %v112
    %v118 = vxor.u32 %v103, %v113
    %v119 = vxor.u32 %v104, %v114
    %v120 = vmul.u32 %v115, 2146121005
    %v121 = vmul.u32 %v116, 2146121005
    %v122 = vmul.u32 %v117, 2146121005
    %v123 = vmul.u32 %v118, 2146121005
    %v124 = vmul.u32 %v119, 2146121005
    %v125 = vshra.s32 %v120, 15
    %v126 = vshra.s32 %v121, 15
    %v127 = vshra.s32 %v122, 15
    %v128 = vshra.s32 %v123, 15
    %v129 = vshra.s32 %v124, 15
    %v130 = vand.u32 %v125, 131071
    %v131 = vand.u32 %v126, 131071
    %v132 = vand.u32 %v127, 131071
    %v133 = vand.u32 %v128, 131071
    %v134 = vand.u32 %v129, 131071
    %v135 = vxor.u32 %v120, %v130
    %v136 = vxor.u32 %v121, %v131
    %v137 = vxor.u32 %v122, %v132
    %v138 = vxor.u32 %v123, %v133
    %v139 = vxor.u32 %v124, %v134
    %v140 = vmul.u32 %v135, 2221713035
    %v141 = vmul.u32 %v136, 2221713035
    %v142 = vmul.u32 %v137, 2221713035
    %v143 = vmul.u32 %v138, 2221713035
    %v144 = vmul.u32 %v139, 2221713035
    %v145 = vshra.s32 %v140, 16
    %v146 = vshra.s32 %v141, 16
    %v147 = vshra.s32 %v142, 16
    %v148 = vshra.s32 %v143, 16
    %v149 = vshra.s32 %v144, 16
    %v150 = vand.u32 %v145, 65535
    %v151 = vand.u32 %v146, 65535
    %v152 = vand.u32 %v147, 65535
    %v153 = vand.u32 %v148, 65535
    %v154 = vand.u32 %v149, 65535
    %v155 = vxor.u32 %v140, %v150
    %v156 = vxor.u32 %v141, %v151
    %v157 = vxor.u32 %v142, %v152
    %v158 = vxor.u32 %v143, %v153
    %v159 = vxor.u32 %v144, %v154
    %v160 = vshra.s32 %v155, 8
    %v161 = vshra.s32 %v156, 8
    %v162 = vshra.s32 %v157, 8
    %v163 = vshra.s32 %v158, 8
    %v164 = vshra.s32 %v159, 8
    %v165 = vand.u32 %v160, 16777215
    %v166 = vand.u32 %v161, 16777215
    %v167 = vand.u32 %v162, 16777215
    %v168 = vand.u32 %v163, 16777215
    %v169 = vand.u32 %v164, 16777215
    %v170 = vcvt.s32.f32 %v165
    %v171 = vcvt.s32.f32 %v166
    %v172 = vcvt.s32.f32 %v167
    %v173 = vcvt.s32.f32 %v168
    %v174 = vcvt.s32.f32 %v169
    %v175 = vadd.f32 %v170, 0.5
    %v176 = vadd.f32 %v171, 0.5
    %v177 = vadd.f32 %v172, 0.5
    %v178 = vadd.f32 %v173, 0.5
    %v179 = vadd.f32 %v174, 0.5
    %v180 = vmul.f32 %v175, 5.9604645e-08
    %v181 = vmul.f32 %v176, 5.9604645e-08
    %v182 = vmul.f32 %v177, 5.9604645e-08
    %v183 = vmul.f32 %v178, 5.9604645e-08
    %v184 = vmul.f32 %v179, 5.9604645e-08
    %v185 = vsub.f32 %v180, 0.5
    %v186 = vsub.f32 %v181, 0.5
    %v187 = vsub.f32 %v182, 0.5
    %v188 = vsub.f32 %v183, 0.5
    %v189 = vsub.f32 %v184, 0.5
    %v190 = vmul.f32 %v185, %v185
    %v191 = vmul.f32 %v186, %v186
    %v192 = vmul.f32 %v187, %v187
    %v193 = vmul.f32 %v188, %v188
    %v194 = vmul.f32 %v189, %v189
    %v195 = vmul.f32 %v190, -25.441061
    %v196 = vmul.f32 %v191, -25.441061
    %v197 = vmul.f32 %v192, -25.441061
    %v198 = vmul.f32 %v193, -25.441061
    %v199 = vmul.f32 %v194, -25.441061
    %v200 = vadd.f32 %v195, 41.391197
    %v201 = vadd.f32 %v196, 41.391197
    %v202 = vadd.f32 %v197, 41.391197
    %v203 = vadd.f32 %v198, 41.391197
    %v204 = vadd.f32 %v199, 41.391197
    %v205 = vmul.f32 %v200, %v190
    %v206 = vmul.f32 %v201, %v191
    %v207 = vmul.f32 %v202, %v192
    %v208 = vmul.f32 %v203, %v193
    %v209 = vmul.f32 %v204, %v194
    %v210 = vadd.f32 %v205, -18.615
    %v211 = vadd.f32 %v206, -18.615
    %v212 = vadd.f32 %v207, -18.615
    %v213 = vadd.f32 %v208, -18.615
    %v214 = vadd.f32 %v209, -18.615
    %v215 = vmul.f32 %v210, %v190
    %v216 = vmul.f32 %v211, %v191
    %v217 = vmul.f32 %v212, %v192
    %v218 = vmul.f32 %v213, %v193
    %v219 = vmul.f32 %v214, %v194
    %v220 = vadd.f32 %v215, 2.5066283
    %v221 = vadd.f32 %v216, 2.5066283
    %v222 = vadd.f32 %v217, 2.5066283
    %v223 = vadd.f32 %v218, 2.5066283
    %v224 = vadd.f32 %v219, 2.5066283
    %v225 = vmul.f32 %v185, %v220
    %v226 = vmul.f32 %v186, %v221
    %v227 = vmul.f32 %v187, %v222
    %v228 = vmul.f32 %v188, %v223
    %v229 = vmul.f32 %v189, %v224
    %v230 = vmul.f32 %v190, 3.130829
    %v231 = vmul.f32 %v191, 3.130829
    %v232 = vmul.f32 %v192, 3.130829
    %v233 = vmul.f32 %v193, 3.130829
    %v234 = vmul.f32 %v194, 3.130829
    %v235 = vadd.f32 %v230, -21.06224
    %v236 = vadd.f32 %v231, -21.06224
    %v237 = vadd.f32 %v232, -21.06224
    %v238 = vadd.f32 %v233, -21.06224
    %v239 = vadd.f32 %v234, -21.06224
    %v240 = vmul.f32 %v235, %v190
    %v241 = vmul.f32 %v236, %v191
    %v242 = vmul.f32 %v237, %v192
    %v243 = vmul.f32 %v238, %v193
    %v244 = vmul.f32 %v239, %v194
    %v245 = vadd.f32 %v240, 23.083368
    %v246 = vadd.f32 %v241, 23.083368
    %v247 = vadd.f32 %v242, 23.083368
    %v248 = vadd.f32 %v243, 23.083368
    %v249 = vadd.f32 %v244, 23.083368
    %v250 = vmul.f32 %v245, %v190
    %v251 = vmul.f32 %v246, %v191
    %v252 = vmul.f32 %v247, %v192
    %v253 = vmul.f32 %v248, %v193
    %v254 = vmul.f32 %v249, %v194
    %v255 = vadd.f32 %v250, -8.473511
    %v256 = vadd.f32 %v251, -8.473511
    %v257 = vadd.f32 %v252, -8.473511
    %v258 = vadd.f32 %v253, -8.473511
    %v259 = vadd.f32 %v254, -8.473511
    %v260 = vmul.f32 %v255, %v190
    %v261 = vmul.f32 %v256, %v191
    %v262 = vmul.f32 %v257, %v192
    %v263 = vmul.f32 %v258, %v193
    %v264 = vmul.f32 %v259, %v194
    %v265 = vadd.f32 %v260, 1.0
    %v266 = vadd.f32 %v261, 1.0
    %v267 = vadd.f32 %v262, 1.0
    %v268 = vadd.f32 %v263, 1.0
    %v269 = vadd.f32 %v264, 1.0
    %v270 = vrcp.pop %v265
    %v271 = vmul.f32 %v265, %v270
    %v272 = vsub.f32 1.0, %v271
    %v273 = vmul.f32 %v270, %v272
    %v274 = vadd.f32 %v270, %v273
    %vm275 = vweird.f32 %v265
    %vm276 = vweird.f32 %v270
    %vm277 = vmor %vm275, %vm276
    %v278 = vsel %vm277, %v270, %v274
    %v279 = vand.u32 2147483647, %v265
    %vm280 = vcmp.eq.f32.partialorder %v279, 8.507059e+37
    %v281 = vand.u32 %v265, 2147483648
    %v282 = vor.u32 1.1754944e-38, %v281
    %v283 = vsel %vm280, %v282, %v278
    %v284 = vmul.f32 %v225, %v283
    %v285 = vrcp.pop %v266
    %v286 = vmul.f32 %v266, %v285
    %v287 = vsub.f32 1.0, %v286
    %v288 = vmul.f32 %v285, %v287
    %v289 = vadd.f32 %v285, %v288
    %vm290 = vweird.f32 %v266
    %vm291 = vweird.f32 %v285
    %vm292 = vmor %vm290, %vm291
    %v293 = vsel %vm292, %v285, %v289
    %v294 = vand.u32 2147483647, %v266
    %vm295 = vcmp.eq.f32.partialorder %v294, 8.507059e+37
    %v296 = vand.u32 %v266, 2147483648
    %v297 = vor.u32 1.1754944e-38, %v296
    %v298 = vsel %vm295, %v297, %v293
    %v299 = vmul.f32 %v226, %v298
    %v300 = vrcp.pop %v267
    %v301 = vmul.f32 %v267, %v300
    %v302 = vsub.f32 1.0, %v301
    %v303 = vmul.f32 %v300, %v302
    %v304 = vadd.f32 %v300, %v303
    %vm305 = vweird.f32 %v267
    %vm306 = vweird.f32 %v300
    %vm307 = vmor %vm305, %vm306
    %v308 = vsel %vm307, %v300, %v304
    %v309 = vand.u32 2147483647, %v267
    %vm310 = vcmp.eq.f32.partialorder %v309, 8.507059e+37
    %v311 = vand.u32 %v267, 2147483648
    %v312 = vor.u32 1.1754944e-38, %v311
    %v313 = vsel %vm310, %v312, %v308
    %v314 = vmul.f32 %v227, %v313
    %v315 = vrcp.pop %v268
    %v316 = vmul.f32 %v268, %v315
    %v317 = vsub.f32 1.0, %v316
    %v318 = vmul.f32 %v315, %v317
    %v319 = vadd.f32 %v315, %v318
    %vm320 = vweird.f32 %v268
    %vm321 = vweird.f32 %v315
    %vm322 = vmor %vm320, %vm321
    %v323 = vsel %vm322, %v315, %v319
    %v324 = vand.u32 2147483647, %v268
    %vm325 = vcmp.eq.f32.partialorder %v324, 8.507059e+37
    %v326 = vand.u32 %v268, 2147483648
    %v327 = vor.u32 1.1754944e-38, %v326
    %v328 = vsel %vm325, %v327, %v323
    %v329 = vmul.f32 %v228, %v328
    %v330 = vrcp.pop %v269
    %v331 = vmul.f32 %v269, %v330
    %v332 = vsub.f32 1.0, %v331
    %v333 = vmul.f32 %v330, %v332
    %v334 = vadd.f32 %v330, %v333
    %vm335 = vweird.f32 %v269
    %vm336 = vweird.f32 %v330
    %vm337 = vmor %vm335, %vm336
    %v338 = vsel %vm337, %v330, %v334
    %v339 = vand.u32 2147483647, %v269
    %vm340 = vcmp.eq.f32.partialorder %v339, 8.507059e+37
    %v341 = vand.u32 %v269, 2147483648
    %v342 = vor.u32 1.1754944e-38, %v341
    %v343 = vsel %vm340, %v342, %v338
    %v344 = vmul.f32 %v229, %v343
    %vm345 = vcmp.gt.f32.partialorder %v185, 0.0
    %vm346 = vcmp.gt.f32.partialorder %v186, 0.0
    %vm347 = vcmp.gt.f32.partialorder %v187, 0.0
    %vm348 = vcmp.gt.f32.partialorder %v188, 0.0
    %vm349 = vcmp.gt.f32.partialorder %v189, 0.0
    %v350 = vsub.f32 1.0, %v180
    %v351 = vsub.f32 1.0, %v181
    %v352 = vsub.f32 1.0, %v182
    %v353 = vsub.f32 1.0, %v183
    %v354 = vsub.f32 1.0, %v184
    %v355 = vsel %vm345, %v350, %v180
    %v356 = vsel %vm346, %v351, %v181
    %v357 = vsel %vm347, %v352, %v182
    %v358 = vsel %vm348, %v353, %v183
    %v359 = vsel %vm349, %v354, %v184
    %v360 = vlog2.pop %v355
    %v361 = vmul.f32 %v360, 0.6931472
    %v362 = vlog2.pop %v356
    %v363 = vmul.f32 %v362, 0.6931472
    %v364 = vlog2.pop %v357
    %v365 = vmul.f32 %v364, 0.6931472
    %v366 = vlog2.pop %v358
    %v367 = vmul.f32 %v366, 0.6931472
    %v368 = vlog2.pop %v359
    %v369 = vmul.f32 %v368, 0.6931472
    %v370 = vsub.f32 0.0, %v361
    %v371 = vsub.f32 0.0, %v363
    %v372 = vsub.f32 0.0, %v365
    %v373 = vsub.f32 0.0, %v367
    %v374 = vsub.f32 0.0, %v369
    %v375 = vlog2.pop %v370
    %v376 = vmul.f32 %v375, 0.6931472
    %v377 = vlog2.pop %v371
    %v378 = vmul.f32 %v377, 0.6931472
    %v379 = vlog2.pop %v372
    %v380 = vmul.f32 %v379, 0.6931472
    %v381 = vlog2.pop %v373
    %v382 = vmul.f32 %v381, 0.6931472
    %v383 = vlog2.pop %v374
    %v384 = vmul.f32 %v383, 0.6931472
    %v385 = vmul.f32 %v376, 3.960315e-07
    %v386 = vmul.f32 %v378, 3.960315e-07
    %v387 = vmul.f32 %v380, 3.960315e-07
    %v388 = vmul.f32 %v382, 3.960315e-07
    %v389 = vmul.f32 %v384, 3.960315e-07
    %v390 = vadd.f32 %v385, 2.8881675e-07
    %v391 = vadd.f32 %v386, 2.8881675e-07
    %v392 = vadd.f32 %v387, 2.8881675e-07
    %v393 = vadd.f32 %v388, 2.8881675e-07
    %v394 = vadd.f32 %v389, 2.8881675e-07
    %v395 = vmul.f32 %v390, %v376
    %v396 = vmul.f32 %v391, %v378
    %v397 = vmul.f32 %v392, %v380
    %v398 = vmul.f32 %v393, %v382
    %v399 = vmul.f32 %v394, %v384
    %v400 = vadd.f32 %v395, 3.2176787e-05
    %v401 = vadd.f32 %v396, 3.2176787e-05
    %v402 = vadd.f32 %v397, 3.2176787e-05
    %v403 = vadd.f32 %v398, 3.2176787e-05
    %v404 = vadd.f32 %v399, 3.2176787e-05
    %v405 = vmul.f32 %v400, %v376
    %v406 = vmul.f32 %v401, %v378
    %v407 = vmul.f32 %v402, %v380
    %v408 = vmul.f32 %v403, %v382
    %v409 = vmul.f32 %v404, %v384
    %v410 = vadd.f32 %v405, 0.00039518965
    %v411 = vadd.f32 %v406, 0.00039518965
    %v412 = vadd.f32 %v407, 0.00039518965
    %v413 = vadd.f32 %v408, 0.00039518965
    %v414 = vadd.f32 %v409, 0.00039518965
    %v415 = vmul.f32 %v410, %v376
    %v416 = vmul.f32 %v411, %v378
    %v417 = vmul.f32 %v412, %v380
    %v418 = vmul.f32 %v413, %v382
    %v419 = vmul.f32 %v414, %v384
    %v420 = vadd.f32 %v415, 0.003840573
    %v421 = vadd.f32 %v416, 0.003840573
    %v422 = vadd.f32 %v417, 0.003840573
    %v423 = vadd.f32 %v418, 0.003840573
    %v424 = vadd.f32 %v419, 0.003840573
    %v425 = vmul.f32 %v420, %v376
    %v426 = vmul.f32 %v421, %v378
    %v427 = vmul.f32 %v422, %v380
    %v428 = vmul.f32 %v423, %v382
    %v429 = vmul.f32 %v424, %v384
    %v430 = vadd.f32 %v425, 0.027643882
    %v431 = vadd.f32 %v426, 0.027643882
    %v432 = vadd.f32 %v427, 0.027643882
    %v433 = vadd.f32 %v428, 0.027643882
    %v434 = vadd.f32 %v429, 0.027643882
    %v435 = vmul.f32 %v430, %v376
    %v436 = vmul.f32 %v431, %v378
    %v437 = vmul.f32 %v432, %v380
    %v438 = vmul.f32 %v433, %v382
    %v439 = vmul.f32 %v434, %v384
    %v440 = vadd.f32 %v435, 0.16079797
    %v441 = vadd.f32 %v436, 0.16079797
    %v442 = vadd.f32 %v437, 0.16079797
    %v443 = vadd.f32 %v438, 0.16079797
    %v444 = vadd.f32 %v439, 0.16079797
    %v445 = vmul.f32 %v440, %v376
    %v446 = vmul.f32 %v441, %v378
    %v447 = vmul.f32 %v442, %v380
    %v448 = vmul.f32 %v443, %v382
    %v449 = vmul.f32 %v444, %v384
    %v450 = vadd.f32 %v445, 0.976169
    %v451 = vadd.f32 %v446, 0.976169
    %v452 = vadd.f32 %v447, 0.976169
    %v453 = vadd.f32 %v448, 0.976169
    %v454 = vadd.f32 %v449, 0.976169
    %v455 = vmul.f32 %v450, %v376
    %v456 = vmul.f32 %v451, %v378
    %v457 = vmul.f32 %v452, %v380
    %v458 = vmul.f32 %v453, %v382
    %v459 = vmul.f32 %v454, %v384
    %v460 = vadd.f32 %v455, 0.33747548
    %v461 = vadd.f32 %v456, 0.33747548
    %v462 = vadd.f32 %v457, 0.33747548
    %v463 = vadd.f32 %v458, 0.33747548
    %v464 = vadd.f32 %v459, 0.33747548
    %v465 = vsub.f32 0.0, %v460
    %v466 = vsub.f32 0.0, %v461
    %v467 = vsub.f32 0.0, %v462
    %v468 = vsub.f32 0.0, %v463
    %v469 = vsub.f32 0.0, %v464
    %v470 = vsel %vm345, %v460, %v465
    %v471 = vsel %vm346, %v461, %v466
    %v472 = vsel %vm347, %v462, %v467
    %v473 = vsel %vm348, %v463, %v468
    %v474 = vsel %vm349, %v464, %v469
    %v475 = vand.u32 2147483647, %v185
    %v476 = vand.u32 2147483647, %v186
    %v477 = vand.u32 2147483647, %v187
    %v478 = vand.u32 2147483647, %v188
    %v479 = vand.u32 2147483647, %v189
    %vm480 = vcmp.le.f32.partialorder %v475, 0.42
    %vm481 = vcmp.le.f32.partialorder %v476, 0.42
    %vm482 = vcmp.le.f32.partialorder %v477, 0.42
    %vm483 = vcmp.le.f32.partialorder %v478, 0.42
    %vm484 = vcmp.le.f32.partialorder %v479, 0.42
    %v485 = vsel %vm480, %v284, %v470
    %v486 = vsel %vm481, %v299, %v471
    %v487 = vsel %vm482, %v314, %v472
    %v488 = vsel %vm483, %v329, %v473
    %v489 = vsel %vm484, %v344, %v474
    %490 = vst [vmem:[#allocation4] sm:$0xff] %v485
    %491 = vst [vmem:[#allocation4 + $0x8] sm:$0xff] %v486
    %492 = vst [vmem:[#allocation4 + $0x10] sm:$0xff] %v487
    %493 = vst [vmem:[#allocation4 + $0x18] sm:$0xff] %v488
    %494 = vst [vmem:[#allocation4 + $0x20] sm:$0xff] %v489
    // Predicated region
    $region2: #{tpu_custom_call.1} parent=1 // pred_check
      _
    $region3: #{tpu_custom_call.1} parent=1 // pred_check_branch
      %496 = sbr.rel (0) target = $region5
    $region4: #{tpu_custom_call.1} parent=1 // pred_region
      %498 = vsyncadd [#allocation5], 0
      %s499 = sshll.u32 [#allocation4], 4
      %s500 = int_to_ptr.vmem [resolvable:$true] %s499
      %s501 = sshll.u32 %s1, 4
      %s502 = int_to_ptr.hbm [resolvable:$true] %s501
      %507 = dma.vmem_to_hbm [thread:$0]  %s500, 640, %s502, [#allocation5], 128, 128, 8
    $region5: #{tpu_custom_call.1} parent=1 // pred_fallthru
      _
    // Predicated region
    $region6: #{tpu_custom_call.1} parent=1 // pred_check
      _
    $region7: #{tpu_custom_call.1} parent=1 // pred_check_branch
      %509 = sbr.rel (0) target = $region9
    $region8: #{tpu_custom_call.1} parent=1 // pred_region
      %511 = dma.done [#allocation5], 640
    $region9: #{tpu_custom_call.1} parent=1 // pred_fallthru
      _
    %512 = vsyncpa [#allocation5], 1

</llo_original>
